<compile_context>
chip_gen: v7x
topology: tpu7x:2x2x1
jax: 0.10.0
libtpu: 0.0.40
codegen_flags: <defaults>
</compile_context>

<pallas_src>
import math

import jax
import jax.numpy as jnp
from jax.experimental import pallas as pl
from jax.experimental.pallas import tpu as pltpu


def mlp_kernel(x_ref, w1_ref, b1_ref, w2_ref, b2_ref, o_ref):
    # First linear (bf16 operands, f32 accumulation) + bias + ReLU.
    h = jnp.dot(x_ref[...], w1_ref[...], preferred_element_type=jnp.float32)
    h = jnp.maximum(h + b1_ref[...], 0.0)          # (TB, hid_p) f32
    # Dropout (eval mode) is identity.
    # Second linear: cast h to bf16 for the native MXU path; accumulate f32.
    y = jnp.dot(h.astype(jnp.bfloat16), w2_ref[...],
                preferred_element_type=jnp.float32)
    o_ref[...] = (y + b2_ref[...]).astype(o_ref.dtype)


def simple_mlp_forward(x, w1, b1, w2, b2, *, block_rows=512):
    """x: (B, in_dim); w1: (in_dim, hid); b1: (hid,); w2: (hid, nc); b2: (nc,)."""
    B, in_dim = x.shape
    hid = w1.shape[1]
    nc = w2.shape[1]
    out_dtype = x.dtype

    # --- Pad hidden dim to a multiple of 128 lanes (zero-pad is exact). ---
    hid_p = ((hid + 127) // 128) * 128
    if hid_p != hid:
        w1 = jnp.pad(w1, ((0, 0), (0, hid_p - hid)))
        b1 = jnp.pad(b1, ((0, hid_p - hid),))
        w2 = jnp.pad(w2, ((0, hid_p - hid), (0, 0)))

    # --- Choose a batch tile (multiple of 8) and pad the batch to fit. ---
    TB = min(block_rows, max(8, ((B + 7) // 8) * 8))
    Bp = ((B + TB - 1) // TB) * TB

    x_in = x.astype(jnp.bfloat16)
    if Bp != B:
        x_in = jnp.pad(x_in, ((0, Bp - B), (0, 0)))

    w1_bf = w1.astype(jnp.bfloat16)
    w2_bf = w2.astype(jnp.bfloat16)
    b1_2d = b1.reshape(1, hid_p).astype(jnp.float32)
    b2_2d = b2.reshape(1, nc).astype(jnp.float32)

    out = pl.pallas_call(
        mlp_kernel,
        out_shape=jax.ShapeDtypeStruct((Bp, nc), out_dtype),
        grid_spec=pl.GridSpec(
            grid=(Bp // TB,),
            in_specs=[
                # x: blocked over the batch -> pipelined HBM traffic.
                pl.BlockSpec((TB, in_dim), lambda i: (i, 0)),
                # Weights / biases: same block for every grid step (resident).
                pl.BlockSpec((in_dim, hid_p), lambda i: (0, 0)),
                pl.BlockSpec((1, hid_p), lambda i: (0, 0)),
                pl.BlockSpec((hid_p, nc), lambda i: (0, 0)),
                pl.BlockSpec((1, nc), lambda i: (0, 0)),
            ],
            out_specs=pl.BlockSpec((TB, nc), lambda i: (i, 0)),
        ),
        compiler_params=pltpu.CompilerParams(
            # Independent batch tiles -> shard across TensorCores on v7x.
            dimension_semantics=("parallel",),
        ),
    )(x_in, w1_bf, b1_2d, w2_bf, b2_2d)

    return out[:B]


def init_params(key, in_dim=768, hid_dim=120, num_class=2, dtype=jnp.float32):
    """Deterministic init mimicking PyTorch nn.Linear default (uniform +/- 1/sqrt(fan_in))."""
    k1, k2, k3, k4 = jax.random.split(key, 4)
    bound1 = 1.0 / math.sqrt(in_dim)
    bound2 = 1.0 / math.sqrt(hid_dim)
    # Stored already transposed: (in, out).
    w1 = jax.random.uniform(k1, (in_dim, hid_dim), dtype, -bound1, bound1)
    b1 = jax.random.uniform(k2, (hid_dim,), dtype, -bound1, bound1)
    w2 = jax.random.uniform(k3, (hid_dim, num_class), dtype, -bound2, bound2)
    b2 = jax.random.uniform(k4, (num_class,), dtype, -bound2, bound2)
    return w1, b1, w2, b2


def reference_forward_f32(x, w1, b1, w2, b2):
    h = jnp.maximum(x @ w1 + b1, 0.0)
    return h @ w2 + b2


def reference_forward_matched(x, w1, b1, w2, b2):
    """Same bf16-input / f32-accumulate recipe as the kernel."""
    h = jnp.dot(x.astype(jnp.bfloat16), w1.astype(jnp.bfloat16),
                preferred_element_type=jnp.float32)
    h = jnp.maximum(h + b1.astype(jnp.float32), 0.0)
    y = jnp.dot(h.astype(jnp.bfloat16), w2.astype(jnp.bfloat16),
                preferred_element_type=jnp.float32)
    return y + b2.astype(jnp.float32)


if __name__ == "__main__":
    key = jax.random.PRNGKey(0)
    kx, kp = jax.random.split(key)

    B, in_dim, hid_dim, num_class = 8, 768, 120, 2
    x = jax.random.normal(kx, (B, in_dim), jnp.float32)
    w1, b1, w2, b2 = init_params(kp, in_dim, hid_dim, num_class)

    out = simple_mlp_forward(x, w1, b1, w2, b2)
    out = jax.block_until_ready(out)
    assert out.shape == (B, num_class), out.shape

    # Tight check vs a precision-matched (bf16-input) reference.
    ref_matched = reference_forward_matched(x, w1, b1, w2, b2)
    assert jnp.allclose(out, ref_matched, atol=2e-2, rtol=2e-2), \
        "mismatch vs matched-precision reference"

    # Loose check vs the pure-f32 reference (bf16 input rounding dominates).
    ref_f32 = reference_forward_f32(x, w1, b1, w2, b2)
    assert jnp.allclose(out, ref_f32, atol=5e-2, rtol=5e-2), \
        "mismatch vs f32 reference"

    print("KERNEL_OK")
</pallas_src>

<mosaic_0001>
module attributes {stable_mosaic.version = 11 : i64} {
  func.func @mlp_kernel(%arg0: i32, %arg1: memref<8x768xbf16, #tpu.memory_space<vmem>>, %arg2: memref<768x128xbf16, #tpu.memory_space<vmem>>, %arg3: memref<1x128xf32, #tpu.memory_space<vmem>>, %arg4: memref<128x2xbf16, #tpu.memory_space<vmem>>, %arg5: memref<1x2xf32, #tpu.memory_space<vmem>>, %arg6: memref<8x2xf32, #tpu.memory_space<vmem>>) attributes {dimension_semantics = [#tpu.dimension_semantics<parallel>], iteration_bounds = array<i64: 1>, scalar_prefetch = 0 : i64, scratch_operands = 0 : i64, tpu.core_type = #tpu.core_type<tc>, window_params = [{transform_indices = @transform_0, window_bounds = array<i64: 8, 768>}, {pipeline_mode = #tpu.pipeline_mode<synchronous>, transform_indices = @transform_1, window_bounds = array<i64: 768, 128>}, {pipeline_mode = #tpu.pipeline_mode<synchronous>, transform_indices = @transform_2, window_bounds = array<i64: 1, 128>}, {pipeline_mode = #tpu.pipeline_mode<synchronous>, transform_indices = @transform_3, window_bounds = array<i64: 128, 2>}, {pipeline_mode = #tpu.pipeline_mode<synchronous>, transform_indices = @transform_4, window_bounds = array<i64: 1, 2>}, {transform_indices = @transform_5, window_bounds = array<i64: 8, 2>}]} {
    %c0 = arith.constant 0 : index
    %c0_0 = arith.constant 0 : index
    %0 = vector.load %arg1[%c0, %c0_0] : memref<8x768xbf16, #tpu.memory_space<vmem>>, vector<8x768xbf16>
    %c0_1 = arith.constant 0 : index
    %c0_2 = arith.constant 0 : index
    %1 = vector.load %arg2[%c0_1, %c0_2] : memref<768x128xbf16, #tpu.memory_space<vmem>>, vector<768x128xbf16>
    %cst = arith.constant dense<0.000000e+00> : vector<8x128xf32>
    %2 = tpu.matmul %0, %1, %cst {dimension_numbers = #tpu.dot_dimension_numbers<[1], [0], [0], [1], [0, 0, 1, 1], [], []>} : vector<8x768xbf16>, vector<768x128xbf16>, vector<8x128xf32> -> vector<8x128xf32>
    %c0_3 = arith.constant 0 : index
    %c0_4 = arith.constant 0 : index
    %3 = vector.load %arg3[%c0_3, %c0_4] : memref<1x128xf32, #tpu.memory_space<vmem>>, vector<1x128xf32>
    %4 = vector.broadcast %3 : vector<1x128xf32> to vector<8x128xf32>
    %5 = arith.addf %2, %4 : vector<8x128xf32>
    %cst_5 = arith.constant 0.000000e+00 : f32
    %6 = vector.broadcast %cst_5 : f32 to vector<8x128xf32>
    %7 = arith.maximumf %5, %6 : vector<8x128xf32>
    %8 = arith.truncf %7 : vector<8x128xf32> to vector<8x128xbf16>
    %c0_6 = arith.constant 0 : index
    %c0_7 = arith.constant 0 : index
    %9 = vector.load %arg4[%c0_6, %c0_7] : memref<128x2xbf16, #tpu.memory_space<vmem>>, vector<128x2xbf16>
    %cst_8 = arith.constant dense<0.000000e+00> : vector<8x2xf32>
    %10 = tpu.matmul %8, %9, %cst_8 {dimension_numbers = #tpu.dot_dimension_numbers<[1], [0], [0], [1], [0, 0, 1, 1], [], []>} : vector<8x128xbf16>, vector<128x2xbf16>, vector<8x2xf32> -> vector<8x2xf32>
    %c0_9 = arith.constant 0 : index
    %c0_10 = arith.constant 0 : index
    %11 = vector.load %arg5[%c0_9, %c0_10] : memref<1x2xf32, #tpu.memory_space<vmem>>, vector<1x2xf32>
    %12 = vector.broadcast %11 : vector<1x2xf32> to vector<8x2xf32>
    %13 = arith.addf %10, %12 : vector<8x2xf32>
    %c0_11 = arith.constant 0 : index
    %c0_12 = arith.constant 0 : index
    %14 = vector.load %arg6[%c0_11, %c0_12] : memref<8x2xf32, #tpu.memory_space<vmem>>, vector<8x2xf32>
    tpu.vector_store %arg6[%c0_11, %c0_12], %13 {strides = array<i32>} : memref<8x2xf32, #tpu.memory_space<vmem>>, vector<8x2xf32>,
    return
  }
  func.func @transform_0(%arg0: i32) -> (i32, i32) {
    %c0_i32 = arith.constant 0 : i32
    %c0_i32_0 = arith.constant 0 : i32
    return %arg0, %c0_i32 : i32, i32
  }
  func.func @transform_1(%arg0: i32) -> (i32, i32) {
    %c0_i32 = arith.constant 0 : i32
    %c0_i32_0 = arith.constant 0 : i32
    %c0_i32_1 = arith.constant 0 : i32
    return %c0_i32, %c0_i32_0 : i32, i32
  }
  func.func @transform_2(%arg0: i32) -> (i32, i32) {
    %c0_i32 = arith.constant 0 : i32
    %c0_i32_0 = arith.constant 0 : i32
    %c0_i32_1 = arith.constant 0 : i32
    return %c0_i32, %c0_i32_0 : i32, i32
  }
  func.func @transform_3(%arg0: i32) -> (i32, i32) {
    %c0_i32 = arith.constant 0 : i32
    %c0_i32_0 = arith.constant 0 : i32
    %c0_i32_1 = arith.constant 0 : i32
    return %c0_i32, %c0_i32_0 : i32, i32
  }
  func.func @transform_4(%arg0: i32) -> (i32, i32) {
    %c0_i32 = arith.constant 0 : i32
    %c0_i32_0 = arith.constant 0 : i32
    %c0_i32_1 = arith.constant 0 : i32
    return %c0_i32, %c0_i32_0 : i32, i32
  }
  func.func @transform_5(%arg0: i32) -> (i32, i32) {
    %c0_i32 = arith.constant 0 : i32
    %c0_i32_0 = arith.constant 0 : i32
    return %arg0, %c0_i32 : i32, i32
  }
}

</mosaic_0001>

<llo_original>
// kernel: tpu_custom_call.1
$region0: #{tpu_custom_call.1}
  #allocation0 [shape = 'u32[]', space=smem, size = 0x4, offset = 0x4, fixed_abs, tag = 'smem constant byte address 0x4 - core index']
  #allocation1 [shape = 'u32[144,128]{1,0:T(1,128)}', space=vmem, size = 0x12000, scoped, tag = 'internal scratch']
  %s0 = inlined_call_operand.vmem [shape: bf16[8,768], index: 0, kind: input, shape index: {}]
  %s1 = inlined_call_operand.hbm [shape: bf16[768,128], index: 1, kind: input, shape index: {}]
  %s2 = inlined_call_operand.vmem [shape: f32[1,128], index: 2, kind: input, shape index: {}]
  %s3 = inlined_call_operand.vmem [shape: bf16[128,2], index: 3, kind: input, shape index: {}]
  %s4 = inlined_call_operand.vmem [shape: f32[1,2], index: 4, kind: input, shape index: {}]
  %s5 = inlined_call_operand.vmem [shape: f32[8,2], index: 5, kind: output, shape index: {}]
  %s6 = sld [smem:[#allocation0]]
  $region34: #{tpu_custom_call.1} parent=0
    _
  %s8 = ssub.s32 1, %s6
  %s9 = scalar_select 0, %s8, %s6
  $region1: #{tpu_custom_call.1} parent=0
    #allocation2 [shape = 'u8[196608]{0}', space=vmem, size = 0x30000, scoped, tag = 'input window, operand 1, single buffered']
    #allocation3 [shape = 's32[1]{0}', space=sflag, size = 0x4, scoped, tag = 'scoped memory for tpu_custom_call.1']
    %10 = vsyncpa [#allocation3], 0
    // Predicated region
    $region2: #{tpu_custom_call.1} parent=1 // pred_check
      _
    $region3: #{tpu_custom_call.1} parent=1 // pred_check_branch
      %12 = sbr.rel (0) target = $region5
    $region4: #{tpu_custom_call.1} parent=1 // pred_region
      _
    $region5: #{tpu_custom_call.1} parent=1 // pred_fallthru
      _
    // Predicated region
    $region6: #{tpu_custom_call.1} parent=1 // pred_check
      _
    $region7: #{tpu_custom_call.1} parent=1 // pred_check_branch
      %14 = sbr.rel (0) target = $region9
    $region8: #{tpu_custom_call.1} parent=1 // pred_region
      %s16 = ssub.s32 6144, 6144
      %17 = vsyncadd [#allocation3], %s16
      %s18 = sshll.u32 [#allocation2], 4
      %s19 = int_to_ptr.vmem [resolvable:$true] %s18
      %24 = dma.hbm_to_vmem [thread:$0]  %s1, 6144, %s19, [#allocation3], 64, 64, 4
    $region9: #{tpu_custom_call.1} parent=1 // pred_fallthru
      _
    // Predicated region
    $region10: #{tpu_custom_call.1} parent=1 // pred_check
      _
    $region11: #{tpu_custom_call.1} parent=1 // pred_check_branch
      %26 = sbr.rel (0) target = $region13
    $region12: #{tpu_custom_call.1} parent=1 // pred_region
      _
    $region13: #{tpu_custom_call.1} parent=1 // pred_fallthru
      _
    // Predicated region
    $region14: #{tpu_custom_call.1} parent=1 // pred_check
      _
    $region15: #{tpu_custom_call.1} parent=1 // pred_check_branch
      %28 = sbr.rel (0) target = $region17
    $region16: #{tpu_custom_call.1} parent=1 // pred_region
      _
    $region17: #{tpu_custom_call.1} parent=1 // pred_fallthru
      _
    // Predicated region
    $region18: #{tpu_custom_call.1} parent=1 // pred_check
      _
    $region19: #{tpu_custom_call.1} parent=1 // pred_check_branch
      %30 = sbr.rel (0) target = $region21
    $region20: #{tpu_custom_call.1} parent=1 // pred_region
      _
    $region21: #{tpu_custom_call.1} parent=1 // pred_fallthru
      _
    // Predicated region
    $region22: #{tpu_custom_call.1} parent=1 // pred_check
      _
    $region23: #{tpu_custom_call.1} parent=1 // pred_check_branch
      %32 = sbr.rel (0) target = $region25
    $region24: #{tpu_custom_call.1} parent=1 // pred_region
      %33 = dma.done [#allocation3], 6144
    $region25: #{tpu_custom_call.1} parent=1 // pred_fallthru
      _
    %v35 = vld [vmem:[%s0] sm:$0xff]
    %v36 = vld [vmem:[%s0 + $0x8] sm:$0xff]
    %v37 = vld [vmem:[%s0 + $0x10] sm:$0xff]
    %v38 = vld [vmem:[#allocation2] sm:$0xf]
    %v39 = vld [vmem:[#allocation2 + $0x4] sm:$0xf]
    %v40 = vld [vmem:[#allocation2 + $0x8] sm:$0xf]
    %v41 = vld [vmem:[#allocation2 + $0xc] sm:$0xf]
    %v42 = vld [vmem:[#allocation2 + $0x10] sm:$0xf]
    %v43 = vld [vmem:[#allocation2 + $0x14] sm:$0xf]
    %v44 = vld [vmem:[#allocation2 + $0x18] sm:$0xf]
    %v45 = vld [vmem:[#allocation2 + $0x1c] sm:$0xf]
    %v46 = vld [vmem:[#allocation2 + $0x20] sm:$0xf]
    %v47 = vld [vmem:[#allocation2 + $0x24] sm:$0xf]
    %v48 = vld [vmem:[#allocation2 + $0x28] sm:$0xf]
    %v49 = vld [vmem:[#allocation2 + $0x2c] sm:$0xf]
    %v50 = vld [vmem:[#allocation2 + $0x30] sm:$0xf]
    %v51 = vld [vmem:[#allocation2 + $0x34] sm:$0xf]
    %v52 = vld [vmem:[#allocation2 + $0x38] sm:$0xf]
    %v53 = vld [vmem:[#allocation2 + $0x3c] sm:$0xf]
    %v54 = vld [vmem:[#allocation2 + $0x40] sm:$0xf]
    %v55 = vld [vmem:[#allocation2 + $0x44] sm:$0xf]
    %v56 = vld [vmem:[#allocation2 + $0x48] sm:$0xf]
    %v57 = vld [vmem:[#allocation2 + $0x4c] sm:$0xf]
    %v58 = vld [vmem:[#allocation2 + $0x50] sm:$0xf]
    %v59 = vld [vmem:[#allocation2 + $0x54] sm:$0xf]
    %v60 = vld [vmem:[#allocation2 + $0x58] sm:$0xf]
    %v61 = vld [vmem:[#allocation2 + $0x5c] sm:$0xf]
    %v62 = vld [vmem:[#allocation2 + $0x60] sm:$0xf]
    %v63 = vld [vmem:[#allocation2 + $0x64] sm:$0xf]
    %v64 = vld [vmem:[#allocation2 + $0x68] sm:$0xf]
    %v65 = vld [vmem:[#allocation2 + $0x6c] sm:$0xf]
    %v66 = vld [vmem:[#allocation2 + $0x70] sm:$0xf]
    %v67 = vld [vmem:[#allocation2 + $0x74] sm:$0xf]
    %v68 = vld [vmem:[#allocation2 + $0x78] sm:$0xf]
    %v69 = vld [vmem:[#allocation2 + $0x7c] sm:$0xf]
    %v70 = vld [vmem:[#allocation2 + $0x80] sm:$0xf]
    %v71 = vld [vmem:[#allocation2 + $0x84] sm:$0xf]
    %v72 = vld [vmem:[#allocation2 + $0x88] sm:$0xf]
    %v73 = vld [vmem:[#allocation2 + $0x8c] sm:$0xf]
    %v74 = vld [vmem:[#allocation2 + $0x90] sm:$0xf]
    %v75 = vld [vmem:[#allocation2 + $0x94] sm:$0xf]
    %v76 = vld [vmem:[#allocation2 + $0x98] sm:$0xf]
    %v77 = vld [vmem:[#allocation2 + $0x9c] sm:$0xf]
    %v78 = vld [vmem:[#allocation2 + $0xa0] sm:$0xf]
    %v79 = vld [vmem:[#allocation2 + $0xa4] sm:$0xf]
    %v80 = vld [vmem:[#allocation2 + $0xa8] sm:$0xf]
    %v81 = vld [vmem:[#allocation2 + $0xac] sm:$0xf]
    %v82 = vld [vmem:[#allocation2 + $0xb0] sm:$0xf]
    %v83 = vld [vmem:[#allocation2 + $0xb4] sm:$0xf]
    %v84 = vld [vmem:[#allocation2 + $0xb8] sm:$0xf]
    %v85 = vld [vmem:[#allocation2 + $0xbc] sm:$0xf]
    %v86 = vld [vmem:[#allocation2 + $0xc0] sm:$0xf]
    %v87 = vld [vmem:[#allocation2 + $0xc4] sm:$0xf]
    %v88 = vld [vmem:[#allocation2 + $0xc8] sm:$0xf]
    %v89 = vld [vmem:[#allocation2 + $0xcc] sm:$0xf]
    %v90 = vld [vmem:[#allocation2 + $0xd0] sm:$0xf]
    %v91 = vld [vmem:[#allocation2 + $0xd4] sm:$0xf]
    %v92 = vld [vmem:[#allocation2 + $0xd8] sm:$0xf]
    %v93 = vld [vmem:[#allocation2 + $0xdc] sm:$0xf]
    %v94 = vld [vmem:[#allocation2 + $0xe0] sm:$0xf]
    %v95 = vld [vmem:[#allocation2 + $0xe4] sm:$0xf]
    %v96 = vld [vmem:[#allocation2 + $0xe8] sm:$0xf]
    %v97 = vld [vmem:[#allocation2 + $0xec] sm:$0xf]
    %v98 = vld [vmem:[#allocation2 + $0xf0] sm:$0xf]
    %v99 = vld [vmem:[#allocation2 + $0xf4] sm:$0xf]
    %v100 = vld [vmem:[#allocation2 + $0xf8] sm:$0xf]
    %v101 = vld [vmem:[#allocation2 + $0xfc] sm:$0xf]
    %v102 = vld [vmem:[#allocation2 + $0x100] sm:$0xf]
    %v103 = vld [vmem:[#allocation2 + $0x104] sm:$0xf]
    %v104 = vld [vmem:[#allocation2 + $0x108] sm:$0xf]
    %v105 = vld [vmem:[#allocation2 + $0x10c] sm:$0xf]
    %v106 = vld [vmem:[#allocation2 + $0x110] sm:$0xf]
    %v107 = vld [vmem:[#allocation2 + $0x114] sm:$0xf]
    %v108 = vld [vmem:[#allocation2 + $0x118] sm:$0xf]
    %v109 = vld [vmem:[#allocation2 + $0x11c] sm:$0xf]
    %v110 = vld [vmem:[#allocation2 + $0x120] sm:$0xf]
    %v111 = vld [vmem:[#allocation2 + $0x124] sm:$0xf]
    %v112 = vld [vmem:[#allocation2 + $0x128] sm:$0xf]
    %v113 = vld [vmem:[#allocation2 + $0x12c] sm:$0xf]
    %v114 = vld [vmem:[#allocation2 + $0x130] sm:$0xf]
    %v115 = vld [vmem:[#allocation2 + $0x134] sm:$0xf]
    %v116 = vld [vmem:[#allocation2 + $0x138] sm:$0xf]
    %v117 = vld [vmem:[#allocation2 + $0x13c] sm:$0xf]
    %v118 = vld [vmem:[#allocation2 + $0x140] sm:$0xf]
    %v119 = vld [vmem:[#allocation2 + $0x144] sm:$0xf]
    %v120 = vld [vmem:[#allocation2 + $0x148] sm:$0xf]
    %v121 = vld [vmem:[#allocation2 + $0x14c] sm:$0xf]
    %v122 = vld [vmem:[#allocation2 + $0x150] sm:$0xf]
    %v123 = vld [vmem:[#allocation2 + $0x154] sm:$0xf]
    %v124 = vld [vmem:[#allocation2 + $0x158] sm:$0xf]
    %v125 = vld [vmem:[#allocation2 + $0x15c] sm:$0xf]
    %v126 = vld [vmem:[#allocation2 + $0x160] sm:$0xf]
    %v127 = vld [vmem:[#allocation2 + $0x164] sm:$0xf]
    %v128 = vld [vmem:[#allocation2 + $0x168] sm:$0xf]
    %v129 = vld [vmem:[#allocation2 + $0x16c] sm:$0xf]
    %v130 = vld [vmem:[#allocation2 + $0x170] sm:$0xf]
    %v131 = vld [vmem:[#allocation2 + $0x174] sm:$0xf]
    %v132 = vld [vmem:[#allocation2 + $0x178] sm:$0xf]
    %v133 = vld [vmem:[#allocation2 + $0x17c] sm:$0xf]
    %v134 = vld [vmem:[%s2] sm:$0x1]
    %v136 = vlaneseq
    %v137 = vshrl.u32 %v136, 7
    %v138 = vsub.s32 0, %v137
    %v139 = vrot.slane %v134, %v138
    %v144 = vunpack.c.l.b16 %v35
    %v145 = vunpack.c.h.b16 %v35
    %v146 = vunpack.c.l.b16 %v36
    %v147 = vunpack.c.h.b16 %v36
    %v148 = vunpack.c.l.b16 %v37
    %v149 = vunpack.c.h.b16 %v37
    %v150 = vpack.c.b16 %v144, %v144
    %v151 = vpack.c.b16 %v145, %v145
    %v152 = vpack.c.b16 %v146, %v146
    %v153 = vpack.c.b16 %v147, %v147
    %v154 = vpack.c.b16 %v148, %v148
    %v155 = vpack.c.b16 %v149, %v149
    %v258 = vunpack.c.l.b16 %v38
    %v259 = vunpack.c.l.b16 %v39
    %v260 = vunpack.c.l.b16 %v40
    %v261 = vunpack.c.l.b16 %v41
    %v262 = vunpack.c.l.b16 %v42
    %v263 = vunpack.c.l.b16 %v43
    %v264 = vunpack.c.l.b16 %v44
    %v265 = vunpack.c.l.b16 %v45
    %v266 = vunpack.c.l.b16 %v46
    %v267 = vunpack.c.l.b16 %v47
    %v268 = vunpack.c.l.b16 %v48
    %v269 = vunpack.c.l.b16 %v49
    %v270 = vunpack.c.l.b16 %v50
    %v271 = vunpack.c.l.b16 %v51
    %v272 = vunpack.c.l.b16 %v52
    %v273 = vunpack.c.l.b16 %v53
    %v274 = vunpack.c.l.b16 %v54
    %v275 = vunpack.c.l.b16 %v55
    %v276 = vunpack.c.l.b16 %v56
    %v277 = vunpack.c.l.b16 %v57
    %v278 = vunpack.c.l.b16 %v58
    %v279 = vunpack.c.l.b16 %v59
    %v280 = vunpack.c.l.b16 %v60
    %v281 = vunpack.c.l.b16 %v61
    %v282 = vunpack.c.l.b16 %v62
    %v283 = vunpack.c.l.b16 %v63
    %v284 = vunpack.c.l.b16 %v64
    %v285 = vunpack.c.l.b16 %v65
    %v286 = vunpack.c.l.b16 %v66
    %v287 = vunpack.c.l.b16 %v67
    %v288 = vunpack.c.l.b16 %v68
    %v289 = vunpack.c.l.b16 %v69
    %v290 = vunpack.c.l.b16 %v70
    %v291 = vunpack.c.l.b16 %v71
    %v292 = vunpack.c.l.b16 %v72
    %v293 = vunpack.c.l.b16 %v73
    %v294 = vunpack.c.l.b16 %v74
    %v295 = vunpack.c.l.b16 %v75
    %v296 = vunpack.c.l.b16 %v76
    %v297 = vunpack.c.l.b16 %v77
    %v298 = vunpack.c.l.b16 %v78
    %v299 = vunpack.c.l.b16 %v79
    %v300 = vunpack.c.l.b16 %v80
    %v301 = vunpack.c.l.b16 %v81
    %v302 = vunpack.c.l.b16 %v82
    %v303 = vunpack.c.l.b16 %v83
    %v304 = vunpack.c.l.b16 %v84
    %v305 = vunpack.c.l.b16 %v85
    %v306 = vunpack.c.l.b16 %v86
    %v307 = vunpack.c.l.b16 %v87
    %v308 = vunpack.c.l.b16 %v88
    %v309 = vunpack.c.l.b16 %v89
    %v310 = vunpack.c.l.b16 %v90
    %v311 = vunpack.c.l.b16 %v91
    %v312 = vunpack.c.l.b16 %v92
    %v313 = vunpack.c.l.b16 %v93
    %v314 = vunpack.c.l.b16 %v94
    %v315 = vunpack.c.l.b16 %v95
    %v316 = vunpack.c.l.b16 %v96
    %v317 = vunpack.c.l.b16 %v97
    %v318 = vunpack.c.l.b16 %v98
    %v319 = vunpack.c.l.b16 %v99
    %v320 = vunpack.c.l.b16 %v100
    %v321 = vunpack.c.l.b16 %v101
    %v322 = vunpack.c.l.b16 %v102
    %v323 = vunpack.c.l.b16 %v103
    %v324 = vunpack.c.l.b16 %v104
    %v325 = vunpack.c.l.b16 %v105
    %v326 = vunpack.c.l.b16 %v106
    %v327 = vunpack.c.l.b16 %v107
    %v328 = vunpack.c.l.b16 %v108
    %v329 = vunpack.c.l.b16 %v109
    %v330 = vunpack.c.l.b16 %v110
    %v331 = vunpack.c.l.b16 %v111
    %v332 = vunpack.c.l.b16 %v112
    %v333 = vunpack.c.l.b16 %v113
    %v334 = vunpack.c.l.b16 %v114
    %v335 = vunpack.c.l.b16 %v115
    %v336 = vunpack.c.l.b16 %v116
    %v337 = vunpack.c.l.b16 %v117
    %v338 = vunpack.c.l.b16 %v118
    %v339 = vunpack.c.l.b16 %v119
    %v340 = vunpack.c.l.b16 %v120
    %v341 = vunpack.c.l.b16 %v121
    %v342 = vunpack.c.l.b16 %v122
    %v343 = vunpack.c.l.b16 %v123
    %v344 = vunpack.c.l.b16 %v124
    %v345 = vunpack.c.l.b16 %v125
    %v346 = vunpack.c.l.b16 %v126
    %v347 = vunpack.c.l.b16 %v127
    %v348 = vunpack.c.l.b16 %v128
    %v349 = vunpack.c.l.b16 %v129
    %v350 = vunpack.c.l.b16 %v130
    %v351 = vunpack.c.l.b16 %v131
    %v352 = vunpack.c.l.b16 %v132
    %v353 = vunpack.c.l.b16 %v133
    %v354 = vpack.c.b16 %v259, %v258
    %v355 = vpack.c.b16 %v261, %v260
    %v356 = vpack.c.b16 %v263, %v262
    %v357 = vpack.c.b16 %v265, %v264
    %v358 = vpack.c.b16 %v267, %v266
    %v359 = vpack.c.b16 %v269, %v268
    %v360 = vpack.c.b16 %v271, %v270
    %v361 = vpack.c.b16 %v273, %v272
    %v362 = vpack.c.b16 %v275, %v274
    %v363 = vpack.c.b16 %v277, %v276
    %v364 = vpack.c.b16 %v279, %v278
    %v365 = vpack.c.b16 %v281, %v280
    %v366 = vpack.c.b16 %v283, %v282
    %v367 = vpack.c.b16 %v285, %v284
    %v368 = vpack.c.b16 %v287, %v286
    %v369 = vpack.c.b16 %v289, %v288
    %v370 = vpack.c.b16 %v291, %v290
    %v371 = vpack.c.b16 %v293, %v292
    %v372 = vpack.c.b16 %v295, %v294
    %v373 = vpack.c.b16 %v297, %v296
    %v374 = vpack.c.b16 %v299, %v298
    %v375 = vpack.c.b16 %v301, %v300
    %v376 = vpack.c.b16 %v303, %v302
    %v377 = vpack.c.b16 %v305, %v304
    %v378 = vpack.c.b16 %v307, %v306
    %v379 = vpack.c.b16 %v309, %v308
    %v380 = vpack.c.b16 %v311, %v310
    %v381 = vpack.c.b16 %v313, %v312
    %v382 = vpack.c.b16 %v315, %v314
    %v383 = vpack.c.b16 %v317, %v316
    %v384 = vpack.c.b16 %v319, %v318
    %v385 = vpack.c.b16 %v321, %v320
    %v386 = vpack.c.b16 %v323, %v322
    %v387 = vpack.c.b16 %v325, %v324
    %v388 = vpack.c.b16 %v327, %v326
    %v389 = vpack.c.b16 %v329, %v328
    %v390 = vpack.c.b16 %v331, %v330
    %v391 = vpack.c.b16 %v333, %v332
    %v392 = vpack.c.b16 %v335, %v334
    %v393 = vpack.c.b16 %v337, %v336
    %v394 = vpack.c.b16 %v339, %v338
    %v395 = vpack.c.b16 %v341, %v340
    %v396 = vpack.c.b16 %v343, %v342
    %v397 = vpack.c.b16 %v345, %v344
    %v398 = vpack.c.b16 %v347, %v346
    %v399 = vpack.c.b16 %v349, %v348
    %v400 = vpack.c.b16 %v351, %v350
    %v401 = vpack.c.b16 %v353, %v352
    %450 = vmatprep.subr.bf16.mxu0 0
    %451 = vmatpush1.bf16.msra.mxu0 %v354
    %452 = vmatprep.subr.bf16.mxu0 0
    %453 = vmatpush1.bf16.msra.mxu0 %v355
    %454 = vmatprep.subr.bf16.mxu0 0
    %455 = vmatpush1.bf16.msra.mxu0 %v356
    %456 = vmatprep.subr.bf16.mxu0 0
    %457 = vmatpush1.bf16.msra.mxu0 %v357
    %458 = vmatprep.subr.bf16.mxu0 0
    %459 = vmatpush1.bf16.msra.mxu0 %v358
    %460 = vmatprep.subr.bf16.mxu0 0
    %461 = vmatpush1.bf16.msra.mxu0 %v359
    %462 = vmatprep.subr.bf16.mxu0 0
    %463 = vmatpush1.bf16.msra.mxu0 %v360
    %464 = vmatprep.subr.bf16.mxu0 0
    %465 = vmatpush1.bf16.msra.mxu0 %v361
    %466 = vmatprep.subr.bf16.mxu0 0
    %467 = vmatpush1.bf16.msra.mxu0 %v362
    %468 = vmatprep.subr.bf16.mxu0 0
    %469 = vmatpush1.bf16.msra.mxu0 %v363
    %470 = vmatprep.subr.bf16.mxu0 0
    %471 = vmatpush1.bf16.msra.mxu0 %v364
    %472 = vmatprep.subr.bf16.mxu0 0
    %473 = vmatpush1.bf16.msra.mxu0 %v365
    %474 = vmatprep.subr.bf16.mxu0 0
    %475 = vmatpush1.bf16.msra.mxu0 %v366
    %476 = vmatprep.subr.bf16.mxu0 0
    %477 = vmatpush1.bf16.msra.mxu0 %v367
    %478 = vmatprep.subr.bf16.mxu0 0
    %479 = vmatpush1.bf16.msra.mxu0 %v368
    %480 = vmatprep.subr.bf16.mxu0 0
    %481 = vmatpush1.bf16.msra.mxu0 %v369
    %482 = vmatprep.mubr.bf16.mxu0 %v151
    %483 = vmatmul.mubr.bf16.gmra.mrb[0].mxu0 %v150
    %v484 = vpop.f32.mrb[0].mxu0
    %v485 = vadd.f32 %v139, %v484
    %v486 = vpop.f32.mrb[0].mxu0
    %v487 = vpop.f32.mrb[0].mxu0
    %v488 = vpop.f32.mrb[0].mxu0
    %489 = vdwg.mxu0
    %490 = vmatprep.subr.bf16.mxu0 0
    %491 = vmatpush1.bf16.msra.mxu0 %v370
    %492 = vmatprep.subr.bf16.mxu0 0
    %493 = vmatpush1.bf16.msra.mxu0 %v371
    %494 = vmatprep.subr.bf16.mxu0 0
    %495 = vmatpush1.bf16.msra.mxu0 %v372
    %496 = vmatprep.subr.bf16.mxu0 0
    %497 = vmatpush1.bf16.msra.mxu0 %v373
    %498 = vmatprep.subr.bf16.mxu0 0
    %499 = vmatpush1.bf16.msra.mxu0 %v374
    %500 = vmatprep.subr.bf16.mxu0 0
    %501 = vmatpush1.bf16.msra.mxu0 %v375
    %502 = vmatprep.subr.bf16.mxu0 0
    %503 = vmatpush1.bf16.msra.mxu0 %v376
    %504 = vmatprep.subr.bf16.mxu0 0
    %505 = vmatpush1.bf16.msra.mxu0 %v377
    %506 = vmatprep.subr.bf16.mxu0 0
    %507 = vmatpush1.bf16.msra.mxu0 %v378
    %508 = vmatprep.subr.bf16.mxu0 0
    %509 = vmatpush1.bf16.msra.mxu0 %v379
    %510 = vmatprep.subr.bf16.mxu0 0
    %511 = vmatpush1.bf16.msra.mxu0 %v380
    %512 = vmatprep.subr.bf16.mxu0 0
    %513 = vmatpush1.bf16.msra.mxu0 %v381
    %514 = vmatprep.subr.bf16.mxu0 0
    %515 = vmatpush1.bf16.msra.mxu0 %v382
    %516 = vmatprep.subr.bf16.mxu0 0
    %517 = vmatpush1.bf16.msra.mxu0 %v383
    %518 = vmatprep.subr.bf16.mxu0 0
    %519 = vmatpush1.bf16.msra.mxu0 %v384
    %520 = vmatprep.subr.bf16.mxu0 0
    %521 = vmatpush1.bf16.msra.mxu0 %v385
    %522 = vmatprep.mubr.bf16.mxu0 %v153
    %523 = vmatmul.mubr.bf16.gmra.mrb[0].mxu0 %v152
    %v524 = vpop.f32.mrb[0].mxu0
    %v525 = vadd.f32 %v485, %v524
    %v526 = vpop.f32.mrb[0].mxu0
    %v527 = vpop.f32.mrb[0].mxu0
    %v528 = vpop.f32.mrb[0].mxu0
    %529 = vdwg.mxu0
    %530 = vmatprep.subr.bf16.mxu0 0
    %531 = vmatpush1.bf16.msra.mxu0 %v386
    %532 = vmatprep.subr.bf16.mxu0 0
    %533 = vmatpush1.bf16.msra.mxu0 %v387
    %534 = vmatprep.subr.bf16.mxu0 0
    %535 = vmatpush1.bf16.msra.mxu0 %v388
    %536 = vmatprep.subr.bf16.mxu0 0
    %537 = vmatpush1.bf16.msra.mxu0 %v389
    %538 = vmatprep.subr.bf16.mxu0 0
    %539 = vmatpush1.bf16.msra.mxu0 %v390
    %540 = vmatprep.subr.bf16.mxu0 0
    %541 = vmatpush1.bf16.msra.mxu0 %v391
    %542 = vmatprep.subr.bf16.mxu0 0
    %543 = vmatpush1.bf16.msra.mxu0 %v392
    %544 = vmatprep.subr.bf16.mxu0 0
    %545 = vmatpush1.bf16.msra.mxu0 %v393
    %546 = vmatprep.subr.bf16.mxu0 0
    %547 = vmatpush1.bf16.msra.mxu0 %v394
    %548 = vmatprep.subr.bf16.mxu0 0
    %549 = vmatpush1.bf16.msra.mxu0 %v395
    %550 = vmatprep.subr.bf16.mxu0 0
    %551 = vmatpush1.bf16.msra.mxu0 %v396
    %552 = vmatprep.subr.bf16.mxu0 0
    %553 = vmatpush1.bf16.msra.mxu0 %v397
    %554 = vmatprep.subr.bf16.mxu0 0
    %555 = vmatpush1.bf16.msra.mxu0 %v398
    %556 = vmatprep.subr.bf16.mxu0 0
    %557 = vmatpush1.bf16.msra.mxu0 %v399
    %558 = vmatprep.subr.bf16.mxu0 0
    %559 = vmatpush1.bf16.msra.mxu0 %v400
    %560 = vmatprep.subr.bf16.mxu0 0
    %561 = vmatpush1.bf16.msra.mxu0 %v401
    %562 = vmatprep.mubr.bf16.mxu0 %v155
    %563 = vmatmul.mubr.bf16.gmra.mrb[0].mxu0 %v154
    %v564 = vpop.f32.mrb[0].mxu0
    %v565 = vadd.f32 %v525, %v564
    %v566 = vpop.f32.mrb[0].mxu0
    %v567 = vpop.f32.mrb[0].mxu0
    %v568 = vpop.f32.mrb[0].mxu0
    %569 = vdwg.mxu0
    %v570 = vmax.f32 %v565, 0.0
    %v571 = vpack.c.bf16 %v570, %v570
    %v572 = vld [vmem:[%s3] sm:$0xf]
    %v573 = vld [vmem:[%s3 + $0x4] sm:$0xf]
    %v574 = vld [vmem:[%s3 + $0x8] sm:$0xf]
    %v575 = vld [vmem:[%s3 + $0xc] sm:$0xf]
    %v576 = vld [vmem:[%s3 + $0x10] sm:$0xf]
    %v577 = vld [vmem:[%s3 + $0x14] sm:$0xf]
    %v578 = vld [vmem:[%s3 + $0x18] sm:$0xf]
    %v579 = vld [vmem:[%s3 + $0x1c] sm:$0xf]
    %v580 = vld [vmem:[%s3 + $0x20] sm:$0xf]
    %v581 = vld [vmem:[%s3 + $0x24] sm:$0xf]
    %v582 = vld [vmem:[%s3 + $0x28] sm:$0xf]
    %v583 = vld [vmem:[%s3 + $0x2c] sm:$0xf]
    %v584 = vld [vmem:[%s3 + $0x30] sm:$0xf]
    %v585 = vld [vmem:[%s3 + $0x34] sm:$0xf]
    %v586 = vld [vmem:[%s3 + $0x38] sm:$0xf]
    %v587 = vld [vmem:[%s3 + $0x3c] sm:$0xf]
    %v588 = vld [vmem:[%s4] sm:$0x1]
    %v590 = vlaneseq
    %v591 = vshrl.u32 %v590, 7
    %v592 = vsub.s32 0, %v591
    %v593 = vrot.slane %v588, %v592
    %v611 = vunpack.c.l.b16 %v572
    %v612 = vunpack.c.l.b16 %v573
    %v613 = vunpack.c.l.b16 %v574
    %v614 = vunpack.c.l.b16 %v575
    %v615 = vunpack.c.l.b16 %v576
    %v616 = vunpack.c.l.b16 %v577
    %v617 = vunpack.c.l.b16 %v578
    %v618 = vunpack.c.l.b16 %v579
    %v619 = vunpack.c.l.b16 %v580
    %v620 = vunpack.c.l.b16 %v581
    %v621 = vunpack.c.l.b16 %v582
    %v622 = vunpack.c.l.b16 %v583
    %v623 = vunpack.c.l.b16 %v584
    %v624 = vunpack.c.l.b16 %v585
    %v625 = vunpack.c.l.b16 %v586
    %v626 = vunpack.c.l.b16 %v587
    %v627 = vpack.c.b16 %v612, %v611
    %v628 = vpack.c.b16 %v614, %v613
    %v629 = vpack.c.b16 %v616, %v615
    %v630 = vpack.c.b16 %v618, %v617
    %v631 = vpack.c.b16 %v620, %v619
    %v632 = vpack.c.b16 %v622, %v621
    %v633 = vpack.c.b16 %v624, %v623
    %v634 = vpack.c.b16 %v626, %v625
    %643 = vmatprep.subr.bf16.mxu0 0
    %644 = vmatpush1.bf16.msra.mxu0 %v627
    %645 = vmatprep.subr.bf16.mxu0 0
    %646 = vmatpush1.bf16.msra.mxu0 %v628
    %647 = vmatprep.subr.bf16.mxu0 0
    %648 = vmatpush1.bf16.msra.mxu0 %v629
    %649 = vmatprep.subr.bf16.mxu0 0
    %650 = vmatpush1.bf16.msra.mxu0 %v630
    %651 = vmatprep.subr.bf16.mxu0 0
    %652 = vmatpush1.bf16.msra.mxu0 %v631
    %653 = vmatprep.subr.bf16.mxu0 0
    %654 = vmatpush1.bf16.msra.mxu0 %v632
    %655 = vmatprep.subr.bf16.mxu0 0
    %656 = vmatpush1.bf16.msra.mxu0 %v633
    %657 = vmatprep.subr.bf16.mxu0 0
    %658 = vmatpush1.bf16.msra.mxu0 %v634
    %659 = vmatprep.subr.bf16.mxu0 0
    %660 = vmatpush1.bf16.msra.mxu0 0
    %661 = vmatprep.subr.bf16.mxu0 0
    %662 = vmatpush1.bf16.msra.mxu0 0
    %663 = vmatprep.subr.bf16.mxu0 0
    %664 = vmatpush1.bf16.msra.mxu0 0
    %665 = vmatprep.subr.bf16.mxu0 0
    %666 = vmatpush1.bf16.msra.mxu0 0
    %667 = vmatprep.subr.bf16.mxu0 0
    %668 = vmatpush1.bf16.msra.mxu0 0
    %669 = vmatprep.subr.bf16.mxu0 0
    %670 = vmatpush1.bf16.msra.mxu0 0
    %671 = vmatprep.subr.bf16.mxu0 0
    %672 = vmatpush1.bf16.msra.mxu0 0
    %673 = vmatprep.subr.bf16.mxu0 0
    %674 = vmatpush1.bf16.msra.mxu0 0
    %675 = vmatprep.mubr.bf16.mxu0 0
    %676 = vmatmul.mubr.bf16.gmra.mrb[0].mxu0 %v571
    %v677 = vpop.f32.mrb[0].mxu0
    %v678 = vadd.f32 %v593, %v677
    %v679 = vpop.f32.mrb[0].mxu0
    %v680 = vpop.f32.mrb[0].mxu0
    %v681 = vpop.f32.mrb[0].mxu0
    %682 = vdwg.mxu0
    %vm683 = vcmask 15360
    %684 = vst.msk [vmem:[%s5] sm:$0xff] %vm683, %v678
    // Predicated region
    $region26: #{tpu_custom_call.1} parent=1 // pred_check
      _
    $region27: #{tpu_custom_call.1} parent=1 // pred_check_branch
      %686 = sbr.rel (0) target = $region29
    $region28: #{tpu_custom_call.1} parent=1 // pred_region
      _
    $region29: #{tpu_custom_call.1} parent=1 // pred_fallthru
      _
    // Predicated region
    $region30: #{tpu_custom_call.1} parent=1 // pred_check
      _
    $region31: #{tpu_custom_call.1} parent=1 // pred_check_branch
      %688 = sbr.rel (0) target = $region33
    $region32: #{tpu_custom_call.1} parent=1 // pred_region
      _
    $region33: #{tpu_custom_call.1} parent=1 // pred_fallthru
      _
    %689 = vsyncpa [#allocation3], 1

</llo_original>
